<compile_context>
chip_gen: v7x
topology: tpu7x:2x2x1
jax: 0.10.0
libtpu: 0.0.40
codegen_flags: <defaults>
</compile_context>

<pallas_src>
import jax
import jax.numpy as jnp
from jax import lax
from jax.experimental import pallas as pl
from jax.experimental.pallas import tpu as pltpu

# dot_general dimension numbers for "x @ W.T" without materializing W.T:
# contract dim 1 of x against dim 1 of W (torch.nn.Linear weight layout).
_NT_DIMS = (((1,), (1,)), ((), ()))


def linmod_hybrid_kernel(state_ref, act_ref, ws_ref, bs_ref, wa_ref, ba_ref,
                         a_ref, b_ref, next_state_ref, next_latent_ref):
    f32 = jnp.float32
    state = state_ref[...]
    act = act_ref[...]

    # Encoders: Linear + tanh.
    state_enc = jnp.tanh(
        lax.dot_general(state, ws_ref[...], _NT_DIMS,
                        preferred_element_type=f32) + bs_ref[...])
    act_enc = jnp.tanh(
        lax.dot_general(act, wa_ref[...], _NT_DIMS,
                        preferred_element_type=f32) + ba_ref[...])

    # Fused dynamics: state_hyb @ A.T + act_hyb @ B.T as ONE MXU pass over
    # x = [state_hyb | act_hyb]  (batch, K)  and  W = [A | B]  (N, K).
    x = jnp.concatenate([state, state_enc, act, act_enc], axis=1)
    w = jnp.concatenate([a_ref[...], b_ref[...]], axis=1)
    next_hyb = lax.dot_general(x, w, _NT_DIMS, preferred_element_type=f32)

    sd = next_state_ref.shape[1]
    next_state_ref[...] = next_hyb[:, :sd].astype(next_state_ref.dtype)
    next_latent_ref[...] = next_hyb[:, sd:].astype(next_latent_ref.dtype)


def linmod_hybrid_forward(state, act, Ws, bs, Wa, ba, A, B):
    """Full LINMOD_HYBRID forward (extra_hidden=False).

    state: (batch, state_dim)          act: (batch, act_dim)
    Ws: (state_enc_dim, state_dim)     bs: (state_enc_dim,)
    Wa: (act_enc_dim, act_dim)         ba: (act_enc_dim,)
    A:  (state_dim+state_enc_dim, state_dim+state_enc_dim)
    B:  (state_dim+state_enc_dim, act_dim+act_enc_dim)
    returns (next_state (batch, state_dim), next_latent (batch, state_enc_dim))
    """
    batch, state_dim = state.shape
    _, act_dim = act.shape
    state_enc_dim, _ = Ws.shape
    act_enc_dim, _ = Wa.shape
    hyb_n = state_dim + state_enc_dim
    hyb_k = hyb_n + act_dim + act_enc_dim
    assert A.shape == (hyb_n, hyb_n)
    assert B.shape == (hyb_n, act_dim + act_enc_dim)

    # 2-D biases for a clean (sublane, lane) VMEM layout.
    bs2 = bs.reshape(1, state_enc_dim)
    ba2 = ba.reshape(1, act_enc_dim)

    operands = (state, act, Ws, bs2, Wa, ba2, A, B)

    flops = 2 * batch * (state_dim * state_enc_dim
                         + act_dim * act_enc_dim
                         + hyb_k * hyb_n)
    transcendentals = batch * (state_enc_dim + act_enc_dim)
    bytes_accessed = sum(int(o.size) * o.dtype.itemsize for o in operands)
    bytes_accessed += batch * hyb_n * state.dtype.itemsize  # outputs

    vmem = pltpu.MemorySpace.VMEM
    return pl.pallas_call(
        linmod_hybrid_kernel,
        out_shape=(
            jax.ShapeDtypeStruct((batch, state_dim), state.dtype),
            jax.ShapeDtypeStruct((batch, state_enc_dim), state.dtype),
        ),
        # Grid-less call: whole arrays resident in VMEM, no software pipeline.
        in_specs=[pl.BlockSpec(memory_space=vmem) for _ in operands],
        out_specs=(pl.BlockSpec(memory_space=vmem),
                   pl.BlockSpec(memory_space=vmem)),
        cost_estimate=pl.CostEstimate(
            flops=flops,
            transcendentals=transcendentals,
            bytes_accessed=bytes_accessed),
    )(*operands)


if __name__ == "__main__":
    key = jax.random.PRNGKey(0)
    keys = jax.random.split(key, 8)

    batch = 8
    state_dim, act_dim = 32, 16
    state_enc_dim, act_enc_dim = 32, 16
    hyb_n = state_dim + state_enc_dim

    # Parameters (torch.nn.Linear layout: y = x @ W.T + b; A/B ~ randn).
    Ws = jax.random.normal(keys[0], (state_enc_dim, state_dim), jnp.float32) * 0.1
    bs = jax.random.normal(keys[1], (state_enc_dim,), jnp.float32) * 0.1
    Wa = jax.random.normal(keys[2], (act_enc_dim, act_dim), jnp.float32) * 0.1
    ba = jax.random.normal(keys[3], (act_enc_dim,), jnp.float32) * 0.1
    A = jax.random.normal(keys[4], (hyb_n, hyb_n), jnp.float32)
    B = jax.random.normal(keys[5], (hyb_n, act_dim + act_enc_dim), jnp.float32)

    state = jax.random.normal(keys[6], (batch, state_dim), jnp.float32)
    act = jax.random.normal(keys[7], (batch, act_dim), jnp.float32)

    next_state, next_latent = jax.block_until_ready(
        linmod_hybrid_forward(state, act, Ws, bs, Wa, ba, A, B))

    # Pure-JAX reference of the PyTorch semantics.
    state_enc = jnp.tanh(state @ Ws.T + bs)
    act_enc = jnp.tanh(act @ Wa.T + ba)
    state_hyb = jnp.concatenate([state, state_enc], axis=1)
    act_hyb = jnp.concatenate([act, act_enc], axis=1)
    ref_hyb = (A @ state_hyb.T).T + (B @ act_hyb.T).T

    assert next_state.shape == (batch, state_dim)
    assert next_latent.shape == (batch, state_enc_dim)
    assert jnp.allclose(next_state, ref_hyb[:, :state_dim], atol=1e-3, rtol=1e-3)
    assert jnp.allclose(next_latent, ref_hyb[:, state_dim:], atol=1e-3, rtol=1e-3)

    print("KERNEL_OK")
</pallas_src>

<mosaic_0001>
module attributes {stable_mosaic.version = 11 : i64} {
  func.func @linmod_hybrid_kernel(%arg0: memref<8x32xf32, #tpu.memory_space<vmem>>, %arg1: memref<8x16xf32, #tpu.memory_space<vmem>>, %arg2: memref<32x32xf32, #tpu.memory_space<vmem>>, %arg3: memref<1x32xf32, #tpu.memory_space<vmem>>, %arg4: memref<16x16xf32, #tpu.memory_space<vmem>>, %arg5: memref<1x16xf32, #tpu.memory_space<vmem>>, %arg6: memref<64x64xf32, #tpu.memory_space<vmem>>, %arg7: memref<64x32xf32, #tpu.memory_space<vmem>>, %arg8: memref<8x32xf32, #tpu.memory_space<vmem>>, %arg9: memref<8x32xf32, #tpu.memory_space<vmem>>) attributes {dimension_semantics = [], scalar_prefetch = 0 : i64, scratch_operands = 0 : i64, tpu.core_type = #tpu.core_type<tc>} {
    %c0 = arith.constant 0 : index
    %c0_0 = arith.constant 0 : index
    %0 = vector.load %arg0[%c0, %c0_0] : memref<8x32xf32, #tpu.memory_space<vmem>>, vector<8x32xf32>
    %c0_1 = arith.constant 0 : index
    %c0_2 = arith.constant 0 : index
    %1 = vector.load %arg1[%c0_1, %c0_2] : memref<8x16xf32, #tpu.memory_space<vmem>>, vector<8x16xf32>
    %c0_3 = arith.constant 0 : index
    %c0_4 = arith.constant 0 : index
    %2 = vector.load %arg2[%c0_3, %c0_4] : memref<32x32xf32, #tpu.memory_space<vmem>>, vector<32x32xf32>
    %cst = arith.constant dense<0.000000e+00> : vector<8x32xf32>
    %3 = tpu.matmul %0, %2, %cst {dimension_numbers = #tpu.dot_dimension_numbers<[1], [1], [0], [0], [0, 0, 1, 0], [], []>} : vector<8x32xf32>, vector<32x32xf32>, vector<8x32xf32> -> vector<8x32xf32>
    %c0_5 = arith.constant 0 : index
    %c0_6 = arith.constant 0 : index
    %4 = vector.load %arg3[%c0_5, %c0_6] : memref<1x32xf32, #tpu.memory_space<vmem>>, vector<1x32xf32>
    %5 = vector.broadcast %4 : vector<1x32xf32> to vector<8x32xf32>
    %6 = arith.addf %3, %5 : vector<8x32xf32>
    %7 = math.tanh %6 : vector<8x32xf32>
    %c0_7 = arith.constant 0 : index
    %c0_8 = arith.constant 0 : index
    %8 = vector.load %arg4[%c0_7, %c0_8] : memref<16x16xf32, #tpu.memory_space<vmem>>, vector<16x16xf32>
    %cst_9 = arith.constant dense<0.000000e+00> : vector<8x16xf32>
    %9 = tpu.matmul %1, %8, %cst_9 {dimension_numbers = #tpu.dot_dimension_numbers<[1], [1], [0], [0], [0, 0, 1, 0], [], []>} : vector<8x16xf32>, vector<16x16xf32>, vector<8x16xf32> -> vector<8x16xf32>
    %c0_10 = arith.constant 0 : index
    %c0_11 = arith.constant 0 : index
    %10 = vector.load %arg5[%c0_10, %c0_11] : memref<1x16xf32, #tpu.memory_space<vmem>>, vector<1x16xf32>
    %11 = vector.broadcast %10 : vector<1x16xf32> to vector<8x16xf32>
    %12 = arith.addf %9, %11 : vector<8x16xf32>
    %13 = math.tanh %12 : vector<8x16xf32>
    %14 = tpu.concatenate %0, %7, %1, %13 in 1 : vector<8x32xf32>, vector<8x32xf32>, vector<8x16xf32>, vector<8x16xf32> -> vector<8x96xf32>
    %c0_12 = arith.constant 0 : index
    %c0_13 = arith.constant 0 : index
    %15 = vector.load %arg6[%c0_12, %c0_13] : memref<64x64xf32, #tpu.memory_space<vmem>>, vector<64x64xf32>
    %c0_14 = arith.constant 0 : index
    %c0_15 = arith.constant 0 : index
    %16 = vector.load %arg7[%c0_14, %c0_15] : memref<64x32xf32, #tpu.memory_space<vmem>>, vector<64x32xf32>
    %17 = tpu.concatenate %15, %16 in 1 : vector<64x64xf32>, vector<64x32xf32> -> vector<64x96xf32>
    %cst_16 = arith.constant dense<0.000000e+00> : vector<8x64xf32>
    %18 = tpu.matmul %14, %17, %cst_16 {dimension_numbers = #tpu.dot_dimension_numbers<[1], [1], [0], [0], [0, 0, 1, 0], [], []>} : vector<8x96xf32>, vector<64x96xf32>, vector<8x64xf32> -> vector<8x64xf32>
    %19 = vector.extract_strided_slice %18 {offsets = [0, 0], sizes = [8, 32], strides = [1, 1]} : vector<8x64xf32> to vector<8x32xf32>
    %c0_17 = arith.constant 0 : index
    %c0_18 = arith.constant 0 : index
    %20 = vector.load %arg8[%c0_17, %c0_18] : memref<8x32xf32, #tpu.memory_space<vmem>>, vector<8x32xf32>
    tpu.vector_store %arg8[%c0_17, %c0_18], %19 {strides = array<i32>} : memref<8x32xf32, #tpu.memory_space<vmem>>, vector<8x32xf32>,
    %21 = vector.extract_strided_slice %18 {offsets = [0, 32], sizes = [8, 32], strides = [1, 1]} : vector<8x64xf32> to vector<8x32xf32>
    %c0_19 = arith.constant 0 : index
    %c0_20 = arith.constant 0 : index
    %22 = vector.load %arg9[%c0_19, %c0_20] : memref<8x32xf32, #tpu.memory_space<vmem>>, vector<8x32xf32>
    tpu.vector_store %arg9[%c0_19, %c0_20], %21 {strides = array<i32>} : memref<8x32xf32, #tpu.memory_space<vmem>>, vector<8x32xf32>,
    return
  }
}

</mosaic_0001>

<llo_original>
// kernel: tpu_custom_call.1
$region0: #{tpu_custom_call.1}
  #allocation0 [shape = 'u32[]', space=smem, size = 0x4, offset = 0x4, fixed_abs, tag = 'smem constant byte address 0x4 - core index']
  #allocation1 [shape = 'u32[144,128]{1,0:T(1,128)}', space=vmem, size = 0x12000, scoped, tag = 'internal scratch']
  %s0 = inlined_call_operand.hbm [shape: f32[8,32], index: 0, kind: input, shape index: {}]
  %s1 = inlined_call_operand.hbm [shape: f32[8,16], index: 1, kind: input, shape index: {}]
  %s2 = inlined_call_operand.vmem [shape: f32[32,32], index: 2, kind: input, shape index: {}]
  %s3 = inlined_call_operand.vmem [shape: f32[1,32], index: 3, kind: input, shape index: {}]
  %s4 = inlined_call_operand.vmem [shape: f32[16,16], index: 4, kind: input, shape index: {}]
  %s5 = inlined_call_operand.vmem [shape: f32[1,16], index: 5, kind: input, shape index: {}]
  %s6 = inlined_call_operand.vmem [shape: f32[64,64], index: 6, kind: input, shape index: {}]
  %s7 = inlined_call_operand.vmem [shape: f32[64,32], index: 7, kind: input, shape index: {}]
  %s8 = inlined_call_operand.hbm [shape: f32[8,32], index: 8, kind: output, shape index: {0}]
  %s9 = inlined_call_operand.hbm [shape: f32[8,32], index: 9, kind: output, shape index: {1}]
  %10 = xla_tuple %s8, %s9
  %s11 = sld [smem:[#allocation0]]
  $region58: #{tpu_custom_call.1} parent=0
    _
  %s13 = ssub.s32 1, %s11
  %s14 = scalar_select 0, %s13, %s11
  $region1: #{tpu_custom_call.1} parent=0
    #allocation2 [shape = 'u8[4096]{0}', space=vmem, size = 0x1000, scoped, tag = 'input window, operand 0, single buffered']
    #allocation3 [shape = 's32[1]{0}', space=sflag, size = 0x4, scoped, tag = 'scoped memory for tpu_custom_call.1']
    #allocation4 [shape = 's32[1]{0}', space=sflag, size = 0x4, scoped, tag = 'scoped memory for tpu_custom_call.1']
    #allocation5 [shape = 'u8[4096]{0}', space=vmem, size = 0x1000, scoped, tag = 'input window, operand 1, single buffered']
    #allocation6 [shape = 's32[1]{0}', space=sflag, size = 0x4, scoped, tag = 'scoped memory for tpu_custom_call.1']
    #allocation7 [shape = 'u8[4096]{0}', space=vmem, size = 0x1000, scoped, tag = 'output window, operand 0, single buffered']
    #allocation8 [shape = 'u8[4096]{0}', space=vmem, size = 0x1000, scoped, tag = 'output window, operand 1, single buffered']
    #allocation9 [shape = 's32[1]{0}', space=sflag, size = 0x4, scoped, tag = 'scoped memory for tpu_custom_call.1']
    %15 = vsyncpa [#allocation3], 0
    %16 = vsyncpa [#allocation6], 0
    %17 = vsyncpa [#allocation4], 0
    %18 = vsyncpa [#allocation9], 0
    // Predicated region
    $region2: #{tpu_custom_call.1} parent=1 // pred_check
      _
    $region3: #{tpu_custom_call.1} parent=1 // pred_check_branch
      %20 = sbr.rel (0) target = $region5
    $region4: #{tpu_custom_call.1} parent=1 // pred_region
      %s22 = ssub.s32 128, 128
      %23 = vsyncadd [#allocation3], %s22
      %s25 = sshll.u32 [#allocation2], 4
      %s26 = int_to_ptr.vmem [resolvable:$true] %s25
      %28 = dma.hbm_to_vmem [thread:$0]  %s0, 128, %s26, [#allocation3]
    $region5: #{tpu_custom_call.1} parent=1 // pred_fallthru
      _
    // Predicated region
    $region6: #{tpu_custom_call.1} parent=1 // pred_check
      _
    $region7: #{tpu_custom_call.1} parent=1 // pred_check_branch
      %30 = sbr.rel (0) target = $region9
    $region8: #{tpu_custom_call.1} parent=1 // pred_region
      %s32 = ssub.s32 128, 128
      %33 = vsyncadd [#allocation6], %s32
      %s35 = sshll.u32 [#allocation5], 4
      %s36 = int_to_ptr.vmem [resolvable:$true] %s35
      %38 = dma.hbm_to_vmem [thread:$0]  %s1, 128, %s36, [#allocation6]
    $region9: #{tpu_custom_call.1} parent=1 // pred_fallthru
      _
    // Predicated region
    $region10: #{tpu_custom_call.1} parent=1 // pred_check
      _
    $region11: #{tpu_custom_call.1} parent=1 // pred_check_branch
      %40 = sbr.rel (0) target = $region13
    $region12: #{tpu_custom_call.1} parent=1 // pred_region
      _
    $region13: #{tpu_custom_call.1} parent=1 // pred_fallthru
      _
    // Predicated region
    $region14: #{tpu_custom_call.1} parent=1 // pred_check
      _
    $region15: #{tpu_custom_call.1} parent=1 // pred_check_branch
      %42 = sbr.rel (0) target = $region17
    $region16: #{tpu_custom_call.1} parent=1 // pred_region
      _
    $region17: #{tpu_custom_call.1} parent=1 // pred_fallthru
      _
    // Predicated region
    $region18: #{tpu_custom_call.1} parent=1 // pred_check
      _
    $region19: #{tpu_custom_call.1} parent=1 // pred_check_branch
      %44 = sbr.rel (0) target = $region21
    $region20: #{tpu_custom_call.1} parent=1 // pred_region
      _
    $region21: #{tpu_custom_call.1} parent=1 // pred_fallthru
      _
    // Predicated region
    $region22: #{tpu_custom_call.1} parent=1 // pred_check
      _
    $region23: #{tpu_custom_call.1} parent=1 // pred_check_branch
      %46 = sbr.rel (0) target = $region25
    $region24: #{tpu_custom_call.1} parent=1 // pred_region
      _
    $region25: #{tpu_custom_call.1} parent=1 // pred_fallthru
      _
    // Predicated region
    $region26: #{tpu_custom_call.1} parent=1 // pred_check
      _
    $region27: #{tpu_custom_call.1} parent=1 // pred_check_branch
      %48 = sbr.rel (0) target = $region29
    $region28: #{tpu_custom_call.1} parent=1 // pred_region
      _
    $region29: #{tpu_custom_call.1} parent=1 // pred_fallthru
      _
    // Predicated region
    $region30: #{tpu_custom_call.1} parent=1 // pred_check
      _
    $region31: #{tpu_custom_call.1} parent=1 // pred_check_branch
      %50 = sbr.rel (0) target = $region33
    $region32: #{tpu_custom_call.1} parent=1 // pred_region
      _
    $region33: #{tpu_custom_call.1} parent=1 // pred_fallthru
      _
    // Predicated region
    $region34: #{tpu_custom_call.1} parent=1 // pred_check
      _
    $region35: #{tpu_custom_call.1} parent=1 // pred_check_branch
      %52 = sbr.rel (0) target = $region37
    $region36: #{tpu_custom_call.1} parent=1 // pred_region
      %53 = dma.done [#allocation3], 128
    $region37: #{tpu_custom_call.1} parent=1 // pred_fallthru
      _
    // Predicated region
    $region38: #{tpu_custom_call.1} parent=1 // pred_check
      _
    $region39: #{tpu_custom_call.1} parent=1 // pred_check_branch
      %55 = sbr.rel (0) target = $region41
    $region40: #{tpu_custom_call.1} parent=1 // pred_region
      %56 = dma.done [#allocation6], 128
    $region41: #{tpu_custom_call.1} parent=1 // pred_fallthru
      _
    %v57 = vld [vmem:[#allocation2] sm:$0xff]
    %v58 = vld [vmem:[#allocation5] sm:$0xff]
    %v59 = vld [vmem:[%s2] sm:$0xff]
    %v60 = vld [vmem:[%s2 + $0x8] sm:$0xff]
    %v61 = vld [vmem:[%s2 + $0x10] sm:$0xff]
    %v62 = vld [vmem:[%s2 + $0x18] sm:$0xff]
    %v63 = vld [vmem:[%s3] sm:$0x1]
    %v65 = vlaneseq
    %v66 = vshrl.u32 %v65, 7
    %v67 = vsub.s32 0, %v66
    %v68 = vrot.slane %v63, %v67
    %vm70 = vcmask 261120
    %v72 = vsel %vm70, %v57, 0
    %v75 = vsel %vm70, %v59, 0
    %v78 = vsel %vm70, %v60, 0
    %v81 = vsel %vm70, %v61, 0
    %v84 = vsel %vm70, %v62, 0
    %86 = vmatprep.subr.mxu0 0.0
    %87 = vmatpush1.xpose.msra.mxu0 %v75
    %88 = vmatprep.subr.mxu0 0.0
    %89 = vmatpush1.xpose.msra.mxu0 %v78
    %90 = vmatprep.subr.mxu0 0.0
    %91 = vmatpush1.xpose.msra.mxu0 %v81
    %92 = vmatprep.subr.mxu0 0.0
    %93 = vmatpush1.xpose.msra.mxu0 %v84
    %94 = vmatprep.subr.mxu0 0.0
    %95 = vmatpush1.xpose.msra.mxu0 0.0
    %96 = vmatprep.subr.mxu0 0.0
    %97 = vmatpush1.xpose.msra.mxu0 0.0
    %98 = vmatprep.subr.mxu0 0.0
    %99 = vmatpush1.xpose.msra.mxu0 0.0
    %100 = vmatprep.subr.mxu0 0.0
    %101 = vmatpush1.xpose.msra.mxu0 0.0
    %102 = vmatprep.subr.mxu0 0.0
    %103 = vmatpush1.xpose.msra.mxu0 0.0
    %104 = vmatprep.subr.mxu0 0.0
    %105 = vmatpush1.xpose.msra.mxu0 0.0
    %106 = vmatprep.subr.mxu0 0.0
    %107 = vmatpush1.xpose.msra.mxu0 0.0
    %108 = vmatprep.subr.mxu0 0.0
    %109 = vmatpush1.xpose.msra.mxu0 0.0
    %110 = vmatprep.subr.mxu0 0.0
    %111 = vmatpush1.xpose.msra.mxu0 0.0
    %112 = vmatprep.subr.mxu0 0.0
    %113 = vmatpush1.xpose.msra.mxu0 0.0
    %114 = vmatprep.subr.mxu0 0.0
    %115 = vmatpush1.xpose.msra.mxu0 0.0
    %116 = vmatprep.subr.mxu0 0.0
    %117 = vmatpush1.xpose.msra.mxu0 0.0
    %118 = vmatprep.subr.mxu0 0.0
    %119 = vmatpush1.xpose.msra.mxu0 0.0
    %120 = vmatprep.subr.mxu0 0.0
    %121 = vmatpush1.xpose.msra.mxu0 0.0
    %122 = vmatprep.subr.mxu0 0.0
    %123 = vmatpush1.xpose.msra.mxu0 0.0
    %124 = vmatprep.subr.mxu0 0.0
    %125 = vmatpush1.xpose.msra.mxu0 0.0
    %126 = vmatprep.subr.mxu0 0.0
    %127 = vmatpush1.xpose.msra.mxu0 0.0
    %128 = vmatprep.subr.mxu0 0.0
    %129 = vmatpush1.xpose.msra.mxu0 0.0
    %130 = vmatprep.subr.mxu0 0.0
    %131 = vmatpush1.xpose.msra.mxu0 0.0
    %132 = vmatprep.subr.mxu0 0.0
    %133 = vmatpush1.xpose.msra.mxu0 0.0
    %134 = vmatprep.subr.mxu0 0.0
    %135 = vmatpush1.xpose.msra.mxu0 0.0
    %136 = vmatprep.subr.mxu0 0.0
    %137 = vmatpush1.xpose.msra.mxu0 0.0
    %138 = vmatprep.subr.mxu0 0.0
    %139 = vmatpush1.xpose.msra.mxu0 0.0
    %140 = vmatprep.subr.mxu0 0.0
    %141 = vmatpush1.xpose.msra.mxu0 0.0
    %142 = vmatprep.subr.mxu0 0.0
    %143 = vmatpush1.xpose.msra.mxu0 0.0
    %144 = vmatprep.subr.mxu0 0.0
    %145 = vmatpush1.xpose.msra.mxu0 0.0
    %146 = vmatprep.subr.mxu0 0.0
    %147 = vmatpush1.xpose.msra.mxu0 0.0
    %148 = vmatprep.subr.mxu0 0.0
    %149 = vmatpush1.xpose.msra.mxu0 0.0
    %150 = vmatprep.mubr.f32.mxu0 0.0
    %151 = vmatmul.mubr.f32.gmra.mrb[0].mxu0 %v72
    %v152 = vpop.f32.mrb[0].mxu0
    %v153 = vadd.f32 %v68, %v152
    %v154 = vpop.f32.mrb[0].mxu0
    %155 = vdwg.mxu0
    %v156 = vtanh.pop %v153
    %v157 = vld [vmem:[%s4] sm:$0xff]
    %v158 = vld [vmem:[%s4 + $0x8] sm:$0xff]
    %v159 = vld [vmem:[%s5] sm:$0x1]
    %v161 = vlaneseq
    %v162 = vshrl.u32 %v161, 7
    %v163 = vsub.s32 0, %v162
    %v164 = vrot.slane %v159, %v163
    %vm166 = vcmask 130048
    %v168 = vsel %vm166, %v58, 0
    %v171 = vsel %vm166, %v157, 0
    %v174 = vsel %vm166, %v158, 0
    %176 = vmatprep.subr.mxu0 0.0
    %177 = vmatpush1.xpose.msra.mxu0 %v171
    %178 = vmatprep.subr.mxu0 0.0
    %179 = vmatpush1.xpose.msra.mxu0 %v174
    %180 = vmatprep.subr.mxu0 0.0
    %181 = vmatpush1.xpose.msra.mxu0 0.0
    %182 = vmatprep.subr.mxu0 0.0
    %183 = vmatpush1.xpose.msra.mxu0 0.0
    %184 = vmatprep.subr.mxu0 0.0
    %185 = vmatpush1.xpose.msra.mxu0 0.0
    %186 = vmatprep.subr.mxu0 0.0
    %187 = vmatpush1.xpose.msra.mxu0 0.0
    %188 = vmatprep.subr.mxu0 0.0
    %189 = vmatpush1.xpose.msra.mxu0 0.0
    %190 = vmatprep.subr.mxu0 0.0
    %191 = vmatpush1.xpose.msra.mxu0 0.0
    %192 = vmatprep.subr.mxu0 0.0
    %193 = vmatpush1.xpose.msra.mxu0 0.0
    %194 = vmatprep.subr.mxu0 0.0
    %195 = vmatpush1.xpose.msra.mxu0 0.0
    %196 = vmatprep.subr.mxu0 0.0
    %197 = vmatpush1.xpose.msra.mxu0 0.0
    %198 = vmatprep.subr.mxu0 0.0
    %199 = vmatpush1.xpose.msra.mxu0 0.0
    %200 = vmatprep.subr.mxu0 0.0
    %201 = vmatpush1.xpose.msra.mxu0 0.0
    %202 = vmatprep.subr.mxu0 0.0
    %203 = vmatpush1.xpose.msra.mxu0 0.0
    %204 = vmatprep.subr.mxu0 0.0
    %205 = vmatpush1.xpose.msra.mxu0 0.0
    %206 = vmatprep.subr.mxu0 0.0
    %207 = vmatpush1.xpose.msra.mxu0 0.0
    %208 = vmatprep.subr.mxu0 0.0
    %209 = vmatpush1.xpose.msra.mxu0 0.0
    %210 = vmatprep.subr.mxu0 0.0
    %211 = vmatpush1.xpose.msra.mxu0 0.0
    %212 = vmatprep.subr.mxu0 0.0
    %213 = vmatpush1.xpose.msra.mxu0 0.0
    %214 = vmatprep.subr.mxu0 0.0
    %215 = vmatpush1.xpose.msra.mxu0 0.0
    %216 = vmatprep.subr.mxu0 0.0
    %217 = vmatpush1.xpose.msra.mxu0 0.0
    %218 = vmatprep.subr.mxu0 0.0
    %219 = vmatpush1.xpose.msra.mxu0 0.0
    %220 = vmatprep.subr.mxu0 0.0
    %221 = vmatpush1.xpose.msra.mxu0 0.0
    %222 = vmatprep.subr.mxu0 0.0
    %223 = vmatpush1.xpose.msra.mxu0 0.0
    %224 = vmatprep.subr.mxu0 0.0
    %225 = vmatpush1.xpose.msra.mxu0 0.0
    %226 = vmatprep.subr.mxu0 0.0
    %227 = vmatpush1.xpose.msra.mxu0 0.0
    %228 = vmatprep.subr.mxu0 0.0
    %229 = vmatpush1.xpose.msra.mxu0 0.0
    %230 = vmatprep.subr.mxu0 0.0
    %231 = vmatpush1.xpose.msra.mxu0 0.0
    %232 = vmatprep.subr.mxu0 0.0
    %233 = vmatpush1.xpose.msra.mxu0 0.0
    %234 = vmatprep.subr.mxu0 0.0
    %235 = vmatpush1.xpose.msra.mxu0 0.0
    %236 = vmatprep.subr.mxu0 0.0
    %237 = vmatpush1.xpose.msra.mxu0 0.0
    %238 = vmatprep.subr.mxu0 0.0
    %239 = vmatpush1.xpose.msra.mxu0 0.0
    %240 = vmatprep.mubr.f32.mxu0 0.0
    %241 = vmatmul.mubr.f32.gmra.mrb[0].mxu0 %v168
    %v242 = vpop.f32.mrb[0].mxu0
    %v243 = vadd.f32 %v164, %v242
    %v244 = vpop.f32.mrb[0].mxu0
    %245 = vdwg.mxu0
    %v246 = vtanh.pop %v243
    %248 = vrot.lane.b32.xlu0 %v156, 32
    %v249 = vpop.permute.xlu0 %248
    %251 = vrot.lane.b32.xlu0 %v58, 64
    %v252 = vpop.permute.xlu0 %251
    %255 = vrot.lane.b32.xlu0 %v246, 80
    %v256 = vpop.permute.xlu0 %255
    %v258 = vsel %vm70, %v57, %v249
    %vm259 = vcmask 523264
    %v260 = vsel %vm259, %v258, %v252
    %vm261 = vcmask 654336
    %v262 = vsel %vm261, %v260, %v256
    %v263 = vld [vmem:[%s6] sm:$0xff]
    %v264 = vld [vmem:[%s6 + $0x8] sm:$0xff]
    %v265 = vld [vmem:[%s6 + $0x10] sm:$0xff]
    %v266 = vld [vmem:[%s6 + $0x18] sm:$0xff]
    %v267 = vld [vmem:[%s6 + $0x20] sm:$0xff]
    %v268 = vld [vmem:[%s6 + $0x28] sm:$0xff]
    %v269 = vld [vmem:[%s6 + $0x30] sm:$0xff]
    %v270 = vld [vmem:[%s6 + $0x38] sm:$0xff]
    %v271 = vld [vmem:[%s7] sm:$0xff]
    %v272 = vld [vmem:[%s7 + $0x8] sm:$0xff]
    %v273 = vld [vmem:[%s7 + $0x10] sm:$0xff]
    %v274 = vld [vmem:[%s7 + $0x18] sm:$0xff]
    %v275 = vld [vmem:[%s7 + $0x20] sm:$0xff]
    %v276 = vld [vmem:[%s7 + $0x28] sm:$0xff]
    %v277 = vld [vmem:[%s7 + $0x30] sm:$0xff]
    %v278 = vld [vmem:[%s7 + $0x38] sm:$0xff]
    %287 = vrot.lane.b32.xlu0 %v271, 64
    %v288 = vpop.permute.xlu0 %287
    %289 = vrot.lane.b32.xlu0 %v272, 64
    %v290 = vpop.permute.xlu0 %289
    %291 = vrot.lane.b32.xlu0 %v273, 64
    %v292 = vpop.permute.xlu0 %291
    %293 = vrot.lane.b32.xlu0 %v274, 64
    %v294 = vpop.permute.xlu0 %293
    %295 = vrot.lane.b32.xlu0 %v275, 64
    %v296 = vpop.permute.xlu0 %295
    %297 = vrot.lane.b32.xlu0 %v276, 64
    %v298 = vpop.permute.xlu0 %297
    %299 = vrot.lane.b32.xlu0 %v277, 64
    %v300 = vpop.permute.xlu0 %299
    %301 = vrot.lane.b32.xlu0 %v278, 64
    %v302 = vpop.permute.xlu0 %301
    %v311 = vsel %vm259, %v263, %v288
    %v312 = vsel %vm259, %v264, %v290
    %v313 = vsel %vm259, %v265, %v292
    %v314 = vsel %vm259, %v266, %v294
    %v315 = vsel %vm259, %v267, %v296
    %v316 = vsel %vm259, %v268, %v298
    %v317 = vsel %vm259, %v269, %v300
    %v318 = vsel %vm259, %v270, %v302
    %vm319 = vcmask 785408
    %v321 = vsel %vm319, %v262, 0
    %v324 = vsel %vm319, %v311, 0
    %v327 = vsel %vm319, %v312, 0
    %v330 = vsel %vm319, %v313, 0
    %v333 = vsel %vm319, %v314, 0
    %v336 = vsel %vm319, %v315, 0
    %v339 = vsel %vm319, %v316, 0
    %v342 = vsel %vm319, %v317, 0
    %v345 = vsel %vm319, %v318, 0
    %347 = vmatprep.subr.mxu0 0.0
    %348 = vmatpush1.xpose.msra.mxu0 %v324
    %349 = vmatprep.subr.mxu0 0.0
    %350 = vmatpush1.xpose.msra.mxu0 %v327
    %351 = vmatprep.subr.mxu0 0.0
    %352 = vmatpush1.xpose.msra.mxu0 %v330
    %353 = vmatprep.subr.mxu0 0.0
    %354 = vmatpush1.xpose.msra.mxu0 %v333
    %355 = vmatprep.subr.mxu0 0.0
    %356 = vmatpush1.xpose.msra.mxu0 %v336
    %357 = vmatprep.subr.mxu0 0.0
    %358 = vmatpush1.xpose.msra.mxu0 %v339
    %359 = vmatprep.subr.mxu0 0.0
    %360 = vmatpush1.xpose.msra.mxu0 %v342
    %361 = vmatprep.subr.mxu0 0.0
    %362 = vmatpush1.xpose.msra.mxu0 %v345
    %363 = vmatprep.subr.mxu0 0.0
    %364 = vmatpush1.xpose.msra.mxu0 0.0
    %365 = vmatprep.subr.mxu0 0.0
    %366 = vmatpush1.xpose.msra.mxu0 0.0
    %367 = vmatprep.subr.mxu0 0.0
    %368 = vmatpush1.xpose.msra.mxu0 0.0
    %369 = vmatprep.subr.mxu0 0.0
    %370 = vmatpush1.xpose.msra.mxu0 0.0
    %371 = vmatprep.subr.mxu0 0.0
    %372 = vmatpush1.xpose.msra.mxu0 0.0
    %373 = vmatprep.subr.mxu0 0.0
    %374 = vmatpush1.xpose.msra.mxu0 0.0
    %375 = vmatprep.subr.mxu0 0.0
    %376 = vmatpush1.xpose.msra.mxu0 0.0
    %377 = vmatprep.subr.mxu0 0.0
    %378 = vmatpush1.xpose.msra.mxu0 0.0
    %379 = vmatprep.subr.mxu0 0.0
    %380 = vmatpush1.xpose.msra.mxu0 0.0
    %381 = vmatprep.subr.mxu0 0.0
    %382 = vmatpush1.xpose.msra.mxu0 0.0
    %383 = vmatprep.subr.mxu0 0.0
    %384 = vmatpush1.xpose.msra.mxu0 0.0
    %385 = vmatprep.subr.mxu0 0.0
    %386 = vmatpush1.xpose.msra.mxu0 0.0
    %387 = vmatprep.subr.mxu0 0.0
    %388 = vmatpush1.xpose.msra.mxu0 0.0
    %389 = vmatprep.subr.mxu0 0.0
    %390 = vmatpush1.xpose.msra.mxu0 0.0
    %391 = vmatprep.subr.mxu0 0.0
    %392 = vmatpush1.xpose.msra.mxu0 0.0
    %393 = vmatprep.subr.mxu0 0.0
    %394 = vmatpush1.xpose.msra.mxu0 0.0
    %395 = vmatprep.subr.mxu0 0.0
    %396 = vmatpush1.xpose.msra.mxu0 0.0
    %397 = vmatprep.subr.mxu0 0.0
    %398 = vmatpush1.xpose.msra.mxu0 0.0
    %399 = vmatprep.subr.mxu0 0.0
    %400 = vmatpush1.xpose.msra.mxu0 0.0
    %401 = vmatprep.subr.mxu0 0.0
    %402 = vmatpush1.xpose.msra.mxu0 0.0
    %403 = vmatprep.subr.mxu0 0.0
    %404 = vmatpush1.xpose.msra.mxu0 0.0
    %405 = vmatprep.subr.mxu0 0.0
    %406 = vmatpush1.xpose.msra.mxu0 0.0
    %407 = vmatprep.subr.mxu0 0.0
    %408 = vmatpush1.xpose.msra.mxu0 0.0
    %409 = vmatprep.subr.mxu0 0.0
    %410 = vmatpush1.xpose.msra.mxu0 0.0
    %411 = vmatprep.mubr.f32.mxu0 0.0
    %412 = vmatmul.mubr.f32.gmra.mrb[0].mxu0 %v321
    %v413 = vpop.f32.mrb[0].mxu0
    %v414 = vadd.f32 0.0, %v413
    %v415 = vpop.f32.mrb[0].mxu0
    %416 = vdwg.mxu0
    %417 = vst.msk [vmem:[#allocation7] sm:$0xff] %vm70, %v414
    %419 = vrot.lane.b32.xlu0 %v414, 96
    %v420 = vpop.permute.xlu0 %419
    %422 = vst.msk [vmem:[#allocation8] sm:$0xff] %vm70, %v420
    // Predicated region
    $region42: #{tpu_custom_call.1} parent=1 // pred_check
      _
    $region43: #{tpu_custom_call.1} parent=1 // pred_check_branch
      %424 = sbr.rel (0) target = $region45
    $region44: #{tpu_custom_call.1} parent=1 // pred_region
      %s426 = ssub.s32 128, 128
      %427 = vsyncadd [#allocation4], %s426
      %s429 = sshll.u32 [#allocation7], 4
      %s430 = int_to_ptr.vmem [resolvable:$true] %s429
      %432 = dma.vmem_to_hbm [thread:$0]  %s430, 128, %s8, [#allocation4]
    $region45: #{tpu_custom_call.1} parent=1 // pred_fallthru
      _
    // Predicated region
    $region46: #{tpu_custom_call.1} parent=1 // pred_check
      _
    $region47: #{tpu_custom_call.1} parent=1 // pred_check_branch
      %434 = sbr.rel (0) target = $region49
    $region48: #{tpu_custom_call.1} parent=1 // pred_region
      %s436 = ssub.s32 128, 128
      %437 = vsyncadd [#allocation9], %s436
      %s439 = sshll.u32 [#allocation8], 4
      %s440 = int_to_ptr.vmem [resolvable:$true] %s439
      %442 = dma.vmem_to_hbm [thread:$0]  %s440, 128, %s9, [#allocation9]
    $region49: #{tpu_custom_call.1} parent=1 // pred_fallthru
      _
    // Predicated region
    $region50: #{tpu_custom_call.1} parent=1 // pred_check
      _
    $region51: #{tpu_custom_call.1} parent=1 // pred_check_branch
      %444 = sbr.rel (0) target = $region53
    $region52: #{tpu_custom_call.1} parent=1 // pred_region
      %445 = dma.done [#allocation4], 128
    $region53: #{tpu_custom_call.1} parent=1 // pred_fallthru
      _
    // Predicated region
    $region54: #{tpu_custom_call.1} parent=1 // pred_check
      _
    $region55: #{tpu_custom_call.1} parent=1 // pred_check_branch
      %447 = sbr.rel (0) target = $region57
    $region56: #{tpu_custom_call.1} parent=1 // pred_region
      %448 = dma.done [#allocation9], 128
    $region57: #{tpu_custom_call.1} parent=1 // pred_fallthru
      _
    %449 = vsyncpa [#allocation3], 1
    %450 = vsyncpa [#allocation6], 1
    %451 = vsyncpa [#allocation4], 1
    %452 = vsyncpa [#allocation9], 1

</llo_original>
